<compile_context>
chip_gen: v5e
topology: v5e:2x2
jax: 0.10.0
libtpu: 0.0.40
codegen_flags: <defaults>
</compile_context>

<pallas_src>
import functools

import jax
import jax.numpy as jnp
from jax.experimental import pallas as pl
from jax.experimental.pallas import tpu as pltpu


def _ffn_kernel(x_ref, w1_ref, w3_ref, w2_ref, o_ref, acc_ref):
    # x_ref: (tm, dim); w1_ref/w3_ref: (dim, th); w2_ref: (th, dim);
    # o_ref: (tm, dim); acc_ref: (tm, dim) f32 scratch.
    k = pl.program_id(1)

    @pl.when(k == 0)
    def _():
        acc_ref[...] = jnp.zeros_like(acc_ref)

    x = x_ref[...]
    # Two MXU passes for the gate; f32 accumulation.
    h1 = jnp.dot(x, w1_ref[...], preferred_element_type=jnp.float32)
    h3 = jnp.dot(x, w3_ref[...], preferred_element_type=jnp.float32)
    # SwiGLU gate in f32 (logistic -> EUP, mul -> VPU); cast back for the
    # down-projection MXU pass.
    h = (h1 * jax.nn.sigmoid(h1)) * h3
    acc_ref[...] += jnp.dot(
        h.astype(x.dtype), w2_ref[...], preferred_element_type=jnp.float32
    )

    @pl.when(k == pl.num_programs(1) - 1)
    def _():
        o_ref[...] = acc_ref[...].astype(o_ref.dtype)


def _round_up(a, b):
    return (a + b - 1) // b * b


def _pick_th(hidden, th_req):
    """Largest multiple-of-128 divisor of `hidden` that is <= th_req."""
    if hidden <= th_req:
        return hidden
    cand = th_req - th_req % 128
    while cand >= 128:
        if hidden % cand == 0:
            return cand
        cand -= 128
    return hidden  # fall back to a single full-hidden tile


@functools.partial(jax.jit, static_argnames=("tm", "th", "vmem_limit_mb"))
def feed_forward(x, w1t, w3t, w2t, *, tm=256, th=512, vmem_limit_mb=64):
    """SwiGLU FFN.  x: (..., dim).  w1t/w3t: (dim, hidden).  w2t: (hidden, dim).

    Pass bf16 x / weights for the fast MXU path (accumulation stays f32).
    Re-derive (tm, th, vmem_limit_mb) per generation's VMEM budget:
    v5e: tm=128, th<=1024; v6e: tm=256, th<=1024; v7x: tm=256, th<=512.
    """
    orig_shape = x.shape
    dim = orig_shape[-1]
    hidden = w1t.shape[1]

    x2d = x.reshape(-1, dim)
    n = x2d.shape[0]

    # Row tile: big enough to fill an MXU pass, never larger than the
    # 8-aligned token count; pad tokens up to a multiple of it.
    tm_eff = min(tm, _round_up(n, 8))
    n_pad = _round_up(n, tm_eff)
    if n_pad != n:
        x2d = jnp.pad(x2d, ((0, n_pad - n), (0, 0)))

    # Hidden tile: multiple-of-128-lane slice dividing hidden; bounds per-step
    # weight VMEM to ~3*dim*th elements (x2 for double-buffering).
    th_eff = _pick_th(hidden, th)
    nk = hidden // th_eff

    bytes_el = x.dtype.itemsize
    cost = pl.CostEstimate(
        flops=6 * n_pad * dim * hidden,
        transcendentals=n_pad * hidden,
        bytes_accessed=(2 * n_pad * dim + 3 * dim * hidden) * bytes_el,
    )

    out = pl.pallas_call(
        _ffn_kernel,
        out_shape=jax.ShapeDtypeStruct((n_pad, dim), x.dtype),
        grid_spec=pltpu.PrefetchScalarGridSpec(
            num_scalar_prefetch=0,
            grid=(n_pad // tm_eff, nk),
            in_specs=[
                pl.BlockSpec((tm_eff, dim), lambda i, k: (i, 0)),    # x rows
                pl.BlockSpec((dim, th_eff), lambda i, k: (0, k)),    # w1^T tile
                pl.BlockSpec((dim, th_eff), lambda i, k: (0, k)),    # w3^T tile
                pl.BlockSpec((th_eff, dim), lambda i, k: (k, 0)),    # w2^T tile
            ],
            out_specs=pl.BlockSpec((tm_eff, dim), lambda i, k: (i, 0)),
            scratch_shapes=[pltpu.VMEM((tm_eff, dim), jnp.float32)],
        ),
        compiler_params=pltpu.CompilerParams(
            # Token axis megacore-parallel (v7x 2 TCs); hidden axis = reduction.
            dimension_semantics=("parallel", "arbitrary"),
            vmem_limit_bytes=vmem_limit_mb << 20,
        ),
        cost_estimate=cost,
    )(x2d, w1t, w3t, w2t)

    if n_pad != n:
        out = out[:n]
    return out.reshape(orig_shape)


def _llama_hidden_dim(dim, multiple_of):
    hidden_dim = 4 * dim
    hidden_dim = int(2 * hidden_dim / 3)
    return multiple_of * ((hidden_dim + multiple_of - 1) // multiple_of)


def _reference(x, w1, w2, w3):
    # Pure-JAX reference (dropout = identity, eval mode), PyTorch weight layout.
    h1 = x @ w1.T
    return ((h1 * jax.nn.sigmoid(h1)) * (x @ w3.T)) @ w2.T


if __name__ == "__main__":
    # --- small shapes implied by the module (f32 correctness check) ---
    batch, seq, dim, multiple_of = 2, 8, 64, 128
    hidden = _llama_hidden_dim(dim, multiple_of)   # -> 256

    key = jax.random.PRNGKey(0)
    kx, k1, k2, k3 = jax.random.split(key, 4)
    x = jax.random.normal(kx, (batch, seq, dim), dtype=jnp.float32)
    # PyTorch Linear weights are (out, in); pre-transpose for the kernel.
    w1 = jax.random.normal(k1, (hidden, dim), dtype=jnp.float32) * 0.05
    w2 = jax.random.normal(k2, (dim, hidden), dtype=jnp.float32) * 0.05
    w3 = jax.random.normal(k3, (hidden, dim), dtype=jnp.float32) * 0.05

    out = jax.block_until_ready(feed_forward(x, w1.T, w3.T, w2.T))
    ref = _reference(x, w1, w2, w3)
    assert out.shape == (batch, seq, dim)
    assert jnp.allclose(out, ref, atol=1e-5, rtol=1e-5), "f32 mismatch vs reference"

    # --- slightly larger shapes: exercise token tiling, hidden-axis streaming
    #     with the accumulator, and the bf16 fast path ---
    batch2, seq2, dim2, multiple_of2 = 2, 256, 256, 128
    hidden2 = _llama_hidden_dim(dim2, multiple_of2)   # -> 768
    kx2, k12, k22, k32 = jax.random.split(jax.random.PRNGKey(1), 4)
    x2 = jax.random.normal(kx2, (batch2, seq2, dim2), dtype=jnp.float32)
    w1b = jax.random.normal(k12, (hidden2, dim2), dtype=jnp.float32) * 0.05
    w2b = jax.random.normal(k22, (dim2, hidden2), dtype=jnp.float32) * 0.05
    w3b = jax.random.normal(k32, (hidden2, dim2), dtype=jnp.float32) * 0.05

    out2 = jax.block_until_ready(
        feed_forward(x2, w1b.T, w3b.T, w2b.T, tm=256, th=384)
    )
    ref2 = _reference(x2, w1b, w2b, w3b)
    assert jnp.allclose(out2, ref2, atol=1e-4, rtol=1e-4), "f32 streamed mismatch"

    out_bf16 = jax.block_until_ready(
        feed_forward(
            x2.astype(jnp.bfloat16),
            w1b.T.astype(jnp.bfloat16),
            w3b.T.astype(jnp.bfloat16),
            w2b.T.astype(jnp.bfloat16),
        )
    )
    assert jnp.allclose(
        out_bf16.astype(jnp.float32), ref2, atol=0.25, rtol=0.05
    ), "bf16 mismatch vs reference"

    print("KERNEL_OK")
</pallas_src>

<mosaic_0001>
module attributes {stable_mosaic.version = 11 : i64} {
  func.func @_ffn_kernel(%arg0: i32, %arg1: i32, %arg2: memref<16x64xf32, #tpu.memory_space<vmem>>, %arg3: memref<64x256xf32, #tpu.memory_space<vmem>>, %arg4: memref<64x256xf32, #tpu.memory_space<vmem>>, %arg5: memref<256x64xf32, #tpu.memory_space<vmem>>, %arg6: memref<16x64xf32, #tpu.memory_space<vmem>>, %arg7: memref<16x64xf32, #tpu.memory_space<vmem>>) attributes {dimension_semantics = [#tpu.dimension_semantics<parallel>, #tpu.dimension_semantics<arbitrary>], iteration_bounds = array<i64: 1, 1>, scalar_prefetch = 0 : i64, scratch_operands = 1 : i64, tpu.core_type = #tpu.core_type<tc>, window_params = [{transform_indices = @transform_0, window_bounds = array<i64: 16, 64>}, {transform_indices = @transform_1, window_bounds = array<i64: 64, 256>}, {transform_indices = @transform_2, window_bounds = array<i64: 64, 256>}, {transform_indices = @transform_3, window_bounds = array<i64: 256, 64>}, {transform_indices = @transform_4, window_bounds = array<i64: 16, 64>}]} {
    %c0_i32 = arith.constant 0 : i32
    %0 = arith.cmpi eq, %arg1, %c0_i32 : i32
    %1 = arith.extui %0 : i1 to i32
    %c0_i32_0 = arith.constant 0 : i32
    %2 = arith.cmpi ne, %1, %c0_i32_0 : i32
    scf.if %2 {
      %cst_17 = arith.constant 0.000000e+00 : f32
      %23 = vector.broadcast %cst_17 : f32 to vector<16x64xf32>
      %c0_18 = arith.constant 0 : index
      %c0_19 = arith.constant 0 : index
      %24 = vector.load %arg7[%c0_18, %c0_19] : memref<16x64xf32, #tpu.memory_space<vmem>>, vector<16x64xf32>
      tpu.vector_store %arg7[%c0_18, %c0_19], %23 {strides = array<i32>} : memref<16x64xf32, #tpu.memory_space<vmem>>, vector<16x64xf32>,
    } else {
    }
    %c0 = arith.constant 0 : index
    %c0_1 = arith.constant 0 : index
    %3 = vector.load %arg2[%c0, %c0_1] : memref<16x64xf32, #tpu.memory_space<vmem>>, vector<16x64xf32>
    %c0_2 = arith.constant 0 : index
    %c0_3 = arith.constant 0 : index
    %4 = vector.load %arg3[%c0_2, %c0_3] : memref<64x256xf32, #tpu.memory_space<vmem>>, vector<64x256xf32>
    %cst = arith.constant dense<0.000000e+00> : vector<16x256xf32>
    %5 = tpu.matmul %3, %4, %cst {dimension_numbers = #tpu.dot_dimension_numbers<[1], [0], [0], [1], [0, 0, 1, 1], [], []>} : vector<16x64xf32>, vector<64x256xf32>, vector<16x256xf32> -> vector<16x256xf32>
    %c0_4 = arith.constant 0 : index
    %c0_5 = arith.constant 0 : index
    %6 = vector.load %arg4[%c0_4, %c0_5] : memref<64x256xf32, #tpu.memory_space<vmem>>, vector<64x256xf32>
    %cst_6 = arith.constant dense<0.000000e+00> : vector<16x256xf32>
    %7 = tpu.matmul %3, %6, %cst_6 {dimension_numbers = #tpu.dot_dimension_numbers<[1], [0], [0], [1], [0, 0, 1, 1], [], []>} : vector<16x64xf32>, vector<64x256xf32>, vector<16x256xf32> -> vector<16x256xf32>
    %8 = arith.negf %5 : vector<16x256xf32>
    %9 = math.exp %8 : vector<16x256xf32>
    %cst_7 = arith.constant 1.000000e+00 : f32
    %10 = vector.broadcast %cst_7 : f32 to vector<16x256xf32>
    %11 = arith.addf %10, %9 : vector<16x256xf32>
    %12 = arith.divf %10, %11 : vector<16x256xf32>
    %13 = arith.mulf %5, %12 : vector<16x256xf32>
    %14 = arith.mulf %13, %7 : vector<16x256xf32>
    %c0_8 = arith.constant 0 : index
    %c0_9 = arith.constant 0 : index
    %15 = vector.load %arg7[%c0_8, %c0_9] : memref<16x64xf32, #tpu.memory_space<vmem>>, vector<16x64xf32>
    %c0_10 = arith.constant 0 : index
    %c0_11 = arith.constant 0 : index
    %16 = vector.load %arg5[%c0_10, %c0_11] : memref<256x64xf32, #tpu.memory_space<vmem>>, vector<256x64xf32>
    %cst_12 = arith.constant dense<0.000000e+00> : vector<16x64xf32>
    %17 = tpu.matmul %14, %16, %cst_12 {dimension_numbers = #tpu.dot_dimension_numbers<[1], [0], [0], [1], [0, 0, 1, 1], [], []>} : vector<16x256xf32>, vector<256x64xf32>, vector<16x64xf32> -> vector<16x64xf32>
    %18 = arith.addf %15, %17 : vector<16x64xf32>
    %c0_13 = arith.constant 0 : index
    %c0_14 = arith.constant 0 : index
    %19 = vector.load %arg7[%c0_13, %c0_14] : memref<16x64xf32, #tpu.memory_space<vmem>>, vector<16x64xf32>
    tpu.vector_store %arg7[%c0_13, %c0_14], %18 {strides = array<i32>} : memref<16x64xf32, #tpu.memory_space<vmem>>, vector<16x64xf32>,
    %c0_i32_15 = arith.constant 0 : i32
    %20 = arith.cmpi eq, %arg1, %c0_i32_15 : i32
    %21 = arith.extui %20 : i1 to i32
    %c0_i32_16 = arith.constant 0 : i32
    %22 = arith.cmpi ne, %21, %c0_i32_16 : i32
    scf.if %22 {
      %c0_17 = arith.constant 0 : index
      %c0_18 = arith.constant 0 : index
      %23 = vector.load %arg7[%c0_17, %c0_18] : memref<16x64xf32, #tpu.memory_space<vmem>>, vector<16x64xf32>
      %c0_19 = arith.constant 0 : index
      %c0_20 = arith.constant 0 : index
      %24 = vector.load %arg6[%c0_19, %c0_20] : memref<16x64xf32, #tpu.memory_space<vmem>>, vector<16x64xf32>
      tpu.vector_store %arg6[%c0_19, %c0_20], %23 {strides = array<i32>} : memref<16x64xf32, #tpu.memory_space<vmem>>, vector<16x64xf32>,
    } else {
    }
    return
  }
  func.func @transform_0(%arg0: i32, %arg1: i32) -> (i32, i32) {
    %c0_i32 = arith.constant 0 : i32
    %c0_i32_0 = arith.constant 0 : i32
    return %arg0, %c0_i32 : i32, i32
  }
  func.func @transform_1(%arg0: i32, %arg1: i32) -> (i32, i32) {
    %c0_i32 = arith.constant 0 : i32
    %c0_i32_0 = arith.constant 0 : i32
    return %c0_i32, %arg1 : i32, i32
  }
  func.func @transform_2(%arg0: i32, %arg1: i32) -> (i32, i32) {
    %c0_i32 = arith.constant 0 : i32
    %c0_i32_0 = arith.constant 0 : i32
    return %c0_i32, %arg1 : i32, i32
  }
  func.func @transform_3(%arg0: i32, %arg1: i32) -> (i32, i32) {
    %c0_i32 = arith.constant 0 : i32
    %c0_i32_0 = arith.constant 0 : i32
    return %arg1, %c0_i32 : i32, i32
  }
  func.func @transform_4(%arg0: i32, %arg1: i32) -> (i32, i32) {
    %c0_i32 = arith.constant 0 : i32
    %c0_i32_0 = arith.constant 0 : i32
    return %arg0, %c0_i32 : i32, i32
  }
}

</mosaic_0001>

<llo_original>
// kernel: feed_forward.1
$region0: #{feed_forward.1}
  #allocation0 [shape = 'u32[]', space=smem, size = 0x4, offset = 0x4, fixed_abs, tag = 'smem constant byte address 0x4 - core index']
  #allocation1 [shape = 'u32[72,128]{1,0:T(1,128)}', space=vmem, size = 0x9000, scoped, tag = 'internal scratch']
  #allocation2 [shape = 'f32[16,64]{1,0:T(8,128)}', space=vmem, size = 0x2000, scoped, tag = 'scratch operand']
  %s0 = inlined_call_operand.vmem [shape: f32[16,64], index: 0, kind: input, shape index: {}]
  %s1 = inlined_call_operand.vmem [shape: f32[64,256], index: 1, kind: input, shape index: {}]
  %s2 = inlined_call_operand.vmem [shape: f32[64,256], index: 2, kind: input, shape index: {}]
  %s3 = inlined_call_operand.vmem [shape: f32[256,64], index: 3, kind: input, shape index: {}]
  %s4 = inlined_call_operand.hbm [shape: f32[16,64], index: 4, kind: output, shape index: {}]
  %s5 = sld [smem:[#allocation0]]
  $region34: #{feed_forward.1} parent=0
    _
  %s7 = ssub.s32 1, %s5
  %s8 = scalar_select 0, %s7, %s5
  $region1: #{feed_forward.1} parent=0
    #allocation3 [shape = 'u8[8192]{0}', space=vmem, size = 0x2000, scoped, tag = 'output window, operand 0, single buffered']
    #allocation4 [shape = 's32[1]{0}', space=sflag, size = 0x4, scoped, tag = 'scoped memory for feed_forward.1']
    %9 = vsyncpa [#allocation4], 0
    // Predicated region
    $region2: #{feed_forward.1} parent=1 // pred_check
      _
    $region3: #{feed_forward.1} parent=1 // pred_check_branch
      %11 = sbr.rel (0) target = $region5
    $region4: #{feed_forward.1} parent=1 // pred_region
      _
    $region5: #{feed_forward.1} parent=1 // pred_fallthru
      _
    // Predicated region
    $region6: #{feed_forward.1} parent=1 // pred_check
      _
    $region7: #{feed_forward.1} parent=1 // pred_check_branch
      %13 = sbr.rel (0) target = $region9
    $region8: #{feed_forward.1} parent=1 // pred_region
      _
    $region9: #{feed_forward.1} parent=1 // pred_fallthru
      _
    // Predicated region
    $region10: #{feed_forward.1} parent=1 // pred_check
      _
    $region11: #{feed_forward.1} parent=1 // pred_check_branch
      %15 = sbr.rel (0) target = $region13
    $region12: #{feed_forward.1} parent=1 // pred_region
      _
    $region13: #{feed_forward.1} parent=1 // pred_fallthru
      _
    // Predicated region
    $region14: #{feed_forward.1} parent=1 // pred_check
      _
    $region15: #{feed_forward.1} parent=1 // pred_check_branch
      %17 = sbr.rel (0) target = $region17
    $region16: #{feed_forward.1} parent=1 // pred_region
      _
    $region17: #{feed_forward.1} parent=1 // pred_fallthru
      _
    %p18 = scmp.eq.s32.totalorder 0, 0
    // Predicated region
    $region18: #{feed_forward.1} parent=1 // pred_check
      %p19 = pneg %p18
    $region19: #{feed_forward.1} parent=1 // pred_check_branch
      %21 = sbr.rel (%p19) target = $region21
    $region20: #{feed_forward.1} parent=1 // pred_region
      %vm22 = vcmask 523264
      %23 = vst.msk [vmem:[#allocation2] sm:$0xff] %vm22, 0.0
      %24 = vst.msk [vmem:[#allocation2 + $0x8] sm:$0xff] %vm22, 0.0
    $region21: #{feed_forward.1} parent=1 // pred_fallthru
      _
    %v25 = vld [vmem:[%s0] sm:$0xff]
    %v26 = vld [vmem:[%s0 + $0x8] sm:$0xff]
    %v27 = vld [vmem:[%s1] sm:$0xff]
    %v28 = vld [vmem:[%s1 + $0x8] sm:$0xff]
    %v29 = vld [vmem:[%s1 + $0x10] sm:$0xff]
    %v30 = vld [vmem:[%s1 + $0x18] sm:$0xff]
    %v31 = vld [vmem:[%s1 + $0x20] sm:$0xff]
    %v32 = vld [vmem:[%s1 + $0x28] sm:$0xff]
    %v33 = vld [vmem:[%s1 + $0x30] sm:$0xff]
    %v34 = vld [vmem:[%s1 + $0x38] sm:$0xff]
    %v35 = vld [vmem:[%s1 + $0x40] sm:$0xff]
    %v36 = vld [vmem:[%s1 + $0x48] sm:$0xff]
    %v37 = vld [vmem:[%s1 + $0x50] sm:$0xff]
    %v38 = vld [vmem:[%s1 + $0x58] sm:$0xff]
    %v39 = vld [vmem:[%s1 + $0x60] sm:$0xff]
    %v40 = vld [vmem:[%s1 + $0x68] sm:$0xff]
    %v41 = vld [vmem:[%s1 + $0x70] sm:$0xff]
    %v42 = vld [vmem:[%s1 + $0x78] sm:$0xff]
    %vm43 = vcmask 523264
    %v45 = vsel %vm43, %v25, 0
    %v48 = vsel %vm43, %v26, 0
    %50 = vmatpush.msra.mxu0 0.0
    %51 = vmatpush.msra.mxu0 0.0
    %52 = vmatpush.msra.mxu0 0.0
    %53 = vmatpush.msra.mxu0 0.0
    %54 = vmatpush.msra.mxu0 0.0
    %55 = vmatpush.msra.mxu0 0.0
    %56 = vmatpush.msra.mxu0 0.0
    %57 = vmatpush.msra.mxu0 0.0
    %58 = vmatpush.msra.mxu0 %v41
    %59 = vmatpush.msra.mxu0 %v39
    %60 = vmatpush.msra.mxu0 %v37
    %61 = vmatpush.msra.mxu0 %v35
    %62 = vmatpush.msra.mxu0 %v33
    %63 = vmatpush.msra.mxu0 %v31
    %64 = vmatpush.msra.mxu0 %v29
    %65 = vmatpush.msra.mxu0 %v27
    %66 = vmatmul.f32.gmra.mxu0 %v45
    %v67 = vpop.f32.mrf.mxu0
    %v68 = vadd.f32 0.0, %v67
    %69 = vmatmul.f32.gmra.mxu0 %v48
    %v70 = vpop.f32.mrf.mxu0
    %v71 = vadd.f32 0.0, %v70
    %72 = vdwg.mxu0
    %73 = vmatpush.msra.mxu0 0.0
    %74 = vmatpush.msra.mxu0 0.0
    %75 = vmatpush.msra.mxu0 0.0
    %76 = vmatpush.msra.mxu0 0.0
    %77 = vmatpush.msra.mxu0 0.0
    %78 = vmatpush.msra.mxu0 0.0
    %79 = vmatpush.msra.mxu0 0.0
    %80 = vmatpush.msra.mxu0 0.0
    %81 = vmatpush.msra.mxu0 %v42
    %82 = vmatpush.msra.mxu0 %v40
    %83 = vmatpush.msra.mxu0 %v38
    %84 = vmatpush.msra.mxu0 %v36
    %85 = vmatpush.msra.mxu0 %v34
    %86 = vmatpush.msra.mxu0 %v32
    %87 = vmatpush.msra.mxu0 %v30
    %88 = vmatpush.msra.mxu0 %v28
    %89 = vmatmul.f32.gmra.mxu0 %v45
    %v90 = vpop.f32.mrf.mxu0
    %v91 = vadd.f32 0.0, %v90
    %92 = vmatmul.f32.gmra.mxu0 %v48
    %v93 = vpop.f32.mrf.mxu0
    %v94 = vadd.f32 0.0, %v93
    %95 = vdwg.mxu0
    %v96 = vld [vmem:[%s2] sm:$0xff]
    %v97 = vld [vmem:[%s2 + $0x8] sm:$0xff]
    %v98 = vld [vmem:[%s2 + $0x10] sm:$0xff]
    %v99 = vld [vmem:[%s2 + $0x18] sm:$0xff]
    %v100 = vld [vmem:[%s2 + $0x20] sm:$0xff]
    %v101 = vld [vmem:[%s2 + $0x28] sm:$0xff]
    %v102 = vld [vmem:[%s2 + $0x30] sm:$0xff]
    %v103 = vld [vmem:[%s2 + $0x38] sm:$0xff]
    %v104 = vld [vmem:[%s2 + $0x40] sm:$0xff]
    %v105 = vld [vmem:[%s2 + $0x48] sm:$0xff]
    %v106 = vld [vmem:[%s2 + $0x50] sm:$0xff]
    %v107 = vld [vmem:[%s2 + $0x58] sm:$0xff]
    %v108 = vld [vmem:[%s2 + $0x60] sm:$0xff]
    %v109 = vld [vmem:[%s2 + $0x68] sm:$0xff]
    %v110 = vld [vmem:[%s2 + $0x70] sm:$0xff]
    %v111 = vld [vmem:[%s2 + $0x78] sm:$0xff]
    %112 = vmatpush.msra.mxu0 0.0
    %113 = vmatpush.msra.mxu0 0.0
    %114 = vmatpush.msra.mxu0 0.0
    %115 = vmatpush.msra.mxu0 0.0
    %116 = vmatpush.msra.mxu0 0.0
    %117 = vmatpush.msra.mxu0 0.0
    %118 = vmatpush.msra.mxu0 0.0
    %119 = vmatpush.msra.mxu0 0.0
    %120 = vmatpush.msra.mxu0 %v110
    %121 = vmatpush.msra.mxu0 %v108
    %122 = vmatpush.msra.mxu0 %v106
    %123 = vmatpush.msra.mxu0 %v104
    %124 = vmatpush.msra.mxu0 %v102
    %125 = vmatpush.msra.mxu0 %v100
    %126 = vmatpush.msra.mxu0 %v98
    %127 = vmatpush.msra.mxu0 %v96
    %128 = vmatmul.f32.gmra.mxu0 %v45
    %v129 = vpop.f32.mrf.mxu0
    %v130 = vadd.f32 0.0, %v129
    %131 = vmatmul.f32.gmra.mxu0 %v48
    %v132 = vpop.f32.mrf.mxu0
    %v133 = vadd.f32 0.0, %v132
    %134 = vdwg.mxu0
    %135 = vmatpush.msra.mxu0 0.0
    %136 = vmatpush.msra.mxu0 0.0
    %137 = vmatpush.msra.mxu0 0.0
    %138 = vmatpush.msra.mxu0 0.0
    %139 = vmatpush.msra.mxu0 0.0
    %140 = vmatpush.msra.mxu0 0.0
    %141 = vmatpush.msra.mxu0 0.0
    %142 = vmatpush.msra.mxu0 0.0
    %143 = vmatpush.msra.mxu0 %v111
    %144 = vmatpush.msra.mxu0 %v109
    %145 = vmatpush.msra.mxu0 %v107
    %146 = vmatpush.msra.mxu0 %v105
    %147 = vmatpush.msra.mxu0 %v103
    %148 = vmatpush.msra.mxu0 %v101
    %149 = vmatpush.msra.mxu0 %v99
    %150 = vmatpush.msra.mxu0 %v97
    %151 = vmatmul.f32.gmra.mxu0 %v45
    %v152 = vpop.f32.mrf.mxu0
    %v153 = vadd.f32 0.0, %v152
    %154 = vmatmul.f32.gmra.mxu0 %v48
    %v155 = vpop.f32.mrf.mxu0
    %v156 = vadd.f32 0.0, %v155
    %157 = vdwg.mxu0
    %v158 = vxor.u32 %v68, 2147483648
    %v159 = vxor.u32 %v91, 2147483648
    %v160 = vxor.u32 %v71, 2147483648
    %v161 = vxor.u32 %v94, 2147483648
    %v162 = vmul.f32 %v158, 1.442695
    %v163 = vpow.pop %v162
    %v164 = vmul.f32 %v159, 1.442695
    %v165 = vpow.pop %v164
    %v166 = vmul.f32 %v160, 1.442695
    %v167 = vpow.pop %v166
    %v168 = vmul.f32 %v161, 1.442695
    %v169 = vpow.pop %v168
    %v170 = vadd.f32 %v163, 1.0
    %v171 = vadd.f32 %v165, 1.0
    %v172 = vadd.f32 %v167, 1.0
    %v173 = vadd.f32 %v169, 1.0
    %v174 = vrcp.pop %v170
    %v175 = vmul.f32 %v170, %v174
    %v176 = vsub.f32 1.0, %v175
    %v177 = vmul.f32 %v174, %v176
    %v178 = vadd.f32 %v174, %v177
    %vm179 = vweird.f32 %v170
    %vm180 = vweird.f32 %v174
    %vm181 = vmor %vm179, %vm180
    %v182 = vsel %vm181, %v174, %v178
    %v183 = vand.u32 2147483647, %v170
    %vm184 = vcmp.eq.f32.partialorder %v183, 8.507059e+37
    %v185 = vand.u32 %v170, 2147483648
    %v186 = vor.u32 1.1754944e-38, %v185
    %v187 = vsel %vm184, %v186, %v182
    %v188 = vmul.f32 1.0, %v187
    %v189 = vrcp.pop %v171
    %v190 = vmul.f32 %v171, %v189
    %v191 = vsub.f32 1.0, %v190
    %v192 = vmul.f32 %v189, %v191
    %v193 = vadd.f32 %v189, %v192
    %vm194 = vweird.f32 %v171
    %vm195 = vweird.f32 %v189
    %vm196 = vmor %vm194, %vm195
    %v197 = vsel %vm196, %v189, %v193
    %v198 = vand.u32 2147483647, %v171
    %vm199 = vcmp.eq.f32.partialorder %v198, 8.507059e+37
    %v200 = vand.u32 %v171, 2147483648
    %v201 = vor.u32 1.1754944e-38, %v200
    %v202 = vsel %vm199, %v201, %v197
    %v203 = vmul.f32 1.0, %v202
    %v204 = vrcp.pop %v172
    %v205 = vmul.f32 %v172, %v204
    %v206 = vsub.f32 1.0, %v205
    %v207 = vmul.f32 %v204, %v206
    %v208 = vadd.f32 %v204, %v207
    %vm209 = vweird.f32 %v172
    %vm210 = vweird.f32 %v204
    %vm211 = vmor %vm209, %vm210
    %v212 = vsel %vm211, %v204, %v208
    %v213 = vand.u32 2147483647, %v172
    %vm214 = vcmp.eq.f32.partialorder %v213, 8.507059e+37
    %v215 = vand.u32 %v172, 2147483648
    %v216 = vor.u32 1.1754944e-38, %v215
    %v217 = vsel %vm214, %v216, %v212
    %v218 = vmul.f32 1.0, %v217
    %v219 = vrcp.pop %v173
    %v220 = vmul.f32 %v173, %v219
    %v221 = vsub.f32 1.0, %v220
    %v222 = vmul.f32 %v219, %v221
    %v223 = vadd.f32 %v219, %v222
    %vm224 = vweird.f32 %v173
    %vm225 = vweird.f32 %v219
    %vm226 = vmor %vm224, %vm225
    %v227 = vsel %vm226, %v219, %v223
    %v228 = vand.u32 2147483647, %v173
    %vm229 = vcmp.eq.f32.partialorder %v228, 8.507059e+37
    %v230 = vand.u32 %v173, 2147483648
    %v231 = vor.u32 1.1754944e-38, %v230
    %v232 = vsel %vm229, %v231, %v227
    %v233 = vmul.f32 1.0, %v232
    %v234 = vmul.f32 %v68, %v188
    %v235 = vmul.f32 %v91, %v203
    %v236 = vmul.f32 %v71, %v218
    %v237 = vmul.f32 %v94, %v233
    %v238 = vmul.f32 %v234, %v130
    %v239 = vmul.f32 %v235, %v153
    %v240 = vmul.f32 %v236, %v133
    %v241 = vmul.f32 %v237, %v156
    %v242 = vld [vmem:[#allocation2] sm:$0xff]
    %v243 = vld [vmem:[#allocation2 + $0x8] sm:$0xff]
    %v244 = vld [vmem:[%s3] sm:$0xff]
    %v245 = vld [vmem:[%s3 + $0x8] sm:$0xff]
    %v246 = vld [vmem:[%s3 + $0x10] sm:$0xff]
    %v247 = vld [vmem:[%s3 + $0x18] sm:$0xff]
    %v248 = vld [vmem:[%s3 + $0x20] sm:$0xff]
    %v249 = vld [vmem:[%s3 + $0x28] sm:$0xff]
    %v250 = vld [vmem:[%s3 + $0x30] sm:$0xff]
    %v251 = vld [vmem:[%s3 + $0x38] sm:$0xff]
    %v252 = vld [vmem:[%s3 + $0x40] sm:$0xff]
    %v253 = vld [vmem:[%s3 + $0x48] sm:$0xff]
    %v254 = vld [vmem:[%s3 + $0x50] sm:$0xff]
    %v255 = vld [vmem:[%s3 + $0x58] sm:$0xff]
    %v256 = vld [vmem:[%s3 + $0x60] sm:$0xff]
    %v257 = vld [vmem:[%s3 + $0x68] sm:$0xff]
    %v258 = vld [vmem:[%s3 + $0x70] sm:$0xff]
    %v259 = vld [vmem:[%s3 + $0x78] sm:$0xff]
    %v260 = vld [vmem:[%s3 + $0x80] sm:$0xff]
    %v261 = vld [vmem:[%s3 + $0x88] sm:$0xff]
    %v262 = vld [vmem:[%s3 + $0x90] sm:$0xff]
    %v263 = vld [vmem:[%s3 + $0x98] sm:$0xff]
    %v264 = vld [vmem:[%s3 + $0xa0] sm:$0xff]
    %v265 = vld [vmem:[%s3 + $0xa8] sm:$0xff]
    %v266 = vld [vmem:[%s3 + $0xb0] sm:$0xff]
    %v267 = vld [vmem:[%s3 + $0xb8] sm:$0xff]
    %v268 = vld [vmem:[%s3 + $0xc0] sm:$0xff]
    %v269 = vld [vmem:[%s3 + $0xc8] sm:$0xff]
    %v270 = vld [vmem:[%s3 + $0xd0] sm:$0xff]
    %v271 = vld [vmem:[%s3 + $0xd8] sm:$0xff]
    %v272 = vld [vmem:[%s3 + $0xe0] sm:$0xff]
    %v273 = vld [vmem:[%s3 + $0xe8] sm:$0xff]
    %v274 = vld [vmem:[%s3 + $0xf0] sm:$0xff]
    %v275 = vld [vmem:[%s3 + $0xf8] sm:$0xff]
    %276 = vmatpush.msra.mxu0 %v259
    %277 = vmatpush.msra.mxu0 %v258
    %278 = vmatpush.msra.mxu0 %v257
    %279 = vmatpush.msra.mxu0 %v256
    %280 = vmatpush.msra.mxu0 %v255
    %281 = vmatpush.msra.mxu0 %v254
    %282 = vmatpush.msra.mxu0 %v253
    %283 = vmatpush.msra.mxu0 %v252
    %284 = vmatpush.msra.mxu0 %v251
    %285 = vmatpush.msra.mxu0 %v250
    %286 = vmatpush.msra.mxu0 %v249
    %287 = vmatpush.msra.mxu0 %v248
    %288 = vmatpush.msra.mxu0 %v247
    %289 = vmatpush.msra.mxu0 %v246
    %290 = vmatpush.msra.mxu0 %v245
    %291 = vmatpush.msra.mxu0 %v244
    %292 = vmatmul.f32.gmra.mxu0 %v238
    %v293 = vpop.f32.mrf.mxu0
    %v294 = vadd.f32 0.0, %v293
    %295 = vmatmul.f32.gmra.mxu0 %v240
    %v296 = vpop.f32.mrf.mxu0
    %v297 = vadd.f32 0.0, %v296
    %298 = vdwg.mxu0
    %299 = vmatpush.msra.mxu0 %v275
    %300 = vmatpush.msra.mxu0 %v274
    %301 = vmatpush.msra.mxu0 %v273
    %302 = vmatpush.msra.mxu0 %v272
    %303 = vmatpush.msra.mxu0 %v271
    %304 = vmatpush.msra.mxu0 %v270
    %305 = vmatpush.msra.mxu0 %v269
    %306 = vmatpush.msra.mxu0 %v268
    %307 = vmatpush.msra.mxu0 %v267
    %308 = vmatpush.msra.mxu0 %v266
    %309 = vmatpush.msra.mxu0 %v265
    %310 = vmatpush.msra.mxu0 %v264
    %311 = vmatpush.msra.mxu0 %v263
    %312 = vmatpush.msra.mxu0 %v262
    %313 = vmatpush.msra.mxu0 %v261
    %314 = vmatpush.msra.mxu0 %v260
    %315 = vmatmul.f32.gmra.mxu0 %v239
    %v316 = vpop.f32.mrf.mxu0
    %v317 = vadd.f32 %v294, %v316
    %318 = vmatmul.f32.gmra.mxu0 %v241
    %v319 = vpop.f32.mrf.mxu0
    %v320 = vadd.f32 %v297, %v319
    %321 = vdwg.mxu0
    %v322 = vadd.f32 %v242, %v317
    %v323 = vadd.f32 %v243, %v320
    %324 = vst.msk [vmem:[#allocation2] sm:$0xff] %vm43, %v322
    %325 = vst.msk [vmem:[#allocation2 + $0x8] sm:$0xff] %vm43, %v323
    // Predicated region
    $region22: #{feed_forward.1} parent=1 // pred_check
      %p326 = pneg %p18
    $region23: #{feed_forward.1} parent=1 // pred_check_branch
      %328 = sbr.rel (%p326) target = $region25
    $region24: #{feed_forward.1} parent=1 // pred_region
      %v329 = vld [vmem:[#allocation2] sm:$0xff]
      %v330 = vld [vmem:[#allocation2 + $0x8] sm:$0xff]
      %331 = vst.msk [vmem:[#allocation3] sm:$0xff] %vm43, %v329
      %332 = vst.msk [vmem:[#allocation3 + $0x8] sm:$0xff] %vm43, %v330
    $region25: #{feed_forward.1} parent=1 // pred_fallthru
      _
    // Predicated region
    $region26: #{feed_forward.1} parent=1 // pred_check
      _
    $region27: #{feed_forward.1} parent=1 // pred_check_branch
      %334 = sbr.rel (0) target = $region29
    $region28: #{feed_forward.1} parent=1 // pred_region
      %336 = vsyncadd [#allocation4], 0
      %s337 = sshll.u32 [#allocation3], 4
      %s338 = int_to_ptr.vmem [resolvable:$true] %s337
      %s339 = sshll.u32 %s4, 4
      %s340 = int_to_ptr.hbm [resolvable:$true] %s339
      %345 = dma.vmem_to_hbm [thread:$0]  %s338, 256, %s340, [#allocation4], 128, 128, 8
    $region29: #{feed_forward.1} parent=1 // pred_fallthru
      _
    // Predicated region
    $region30: #{feed_forward.1} parent=1 // pred_check
      _
    $region31: #{feed_forward.1} parent=1 // pred_check_branch
      %347 = sbr.rel (0) target = $region33
    $region32: #{feed_forward.1} parent=1 // pred_region
      %349 = dma.done [#allocation4], 256
    $region33: #{feed_forward.1} parent=1 // pred_fallthru
      _
    %350 = vsyncpa [#allocation4], 1

</llo_original>
